<compile_context>
chip_gen: v5e
topology: v5e:2x2
jax: 0.10.0
libtpu: 0.0.40
codegen_flags: <defaults>
</compile_context>

<pallas_src>
import functools

import jax
import jax.numpy as jnp
from jax.experimental import pallas as pl
from jax.experimental.pallas import tpu as pltpu


def _round_up(x: int, n: int) -> int:
    return (x + n - 1) // n * n


_RESIDENT_WEIGHT_LIMIT = 12 << 20   # padded bf16 W1+W2 <= 12 MiB -> keep VMEM-resident
_VMEM_BUDGET = 40 << 20             # target per-kernel VMEM footprint (fits v7x 64 MiB)
_VMEM_LIMIT = 64 << 20              # scoped-VMEM limit handed to Mosaic (v5e default is 16 MiB)


# ---------------------------------------------------------------------------
# Kernels
# ---------------------------------------------------------------------------
def _mlp_resident_kernel(x_ref, w1_ref, b1_ref, w2_ref, b2_ref, o_ref):
    """Weights fully VMEM-resident: one fused pass per row tile."""
    # fc1: bf16 MXU matmul, f32 accumulation; bias + ReLU in f32.
    h = jnp.dot(x_ref[...], w1_ref[...], preferred_element_type=jnp.float32)
    h = jnp.maximum(h + b1_ref[...], 0.0)
    # dropout(p=0.0) is the identity -> no-op.
    # TODO(synk): training-mode dropout with p > 0 (RNG mask) not implemented.
    o = jnp.dot(h.astype(w2_ref.dtype), w2_ref[...],
                preferred_element_type=jnp.float32) + b2_ref[...]
    o_ref[...] = o.astype(o_ref.dtype)


def _mlp_stream_kernel(x_ref, w1_ref, b1_ref, w2_ref, b2_ref, o_ref, acc_ref):
    """Hidden dim streamed in chunks (k axis), f32 accumulator in VMEM."""
    k = pl.program_id(1)

    @pl.when(k == 0)
    def _init():
        acc_ref[...] = jnp.zeros_like(acc_ref)

    # fc1 chunk: (tm, in_pad) @ (in_pad, tk) -> f32, + bias chunk, ReLU.
    h = jnp.dot(x_ref[...], w1_ref[...], preferred_element_type=jnp.float32)
    h = jnp.maximum(h + b1_ref[...], 0.0)
    # dropout(p=0.0) identity.  TODO(synk): p > 0 not implemented.
    acc_ref[...] += jnp.dot(h.astype(w2_ref.dtype), w2_ref[...],
                            preferred_element_type=jnp.float32)

    @pl.when(k == pl.num_programs(1) - 1)
    def _finalize():
        o_ref[...] = (acc_ref[...] + b2_ref[...]).astype(o_ref.dtype)


# ---------------------------------------------------------------------------
# Parameter preparation (hoisted out of the hot path)
# ---------------------------------------------------------------------------
def prepare_params(w1, b1, w2, b2, compute_dtype=jnp.bfloat16):
    """One-time cast + pad of the MLP parameters.

    Weights are stored transposed vs. nn.Linear.weight: w1:(in_dim, h_dim),
    w2:(h_dim, out_d); biases 1-D.  Returns (w1p, b1p, w2p, b2p) padded to
    MXU/lane-friendly shapes.  Call once and reuse across forward calls.
    """
    in_dim, h_dim = w1.shape
    out_d = w2.shape[1]
    in_pad = _round_up(in_dim, 128)                       # fc1 K granule (lane-dense x)
    h_pad = _round_up(h_dim, 256)                         # 256 granule (v6e/v7x MXU)
    out_pad = 128 if out_d <= 128 else _round_up(out_d, 256)

    w1p = jnp.pad(w1.astype(compute_dtype),
                  ((0, in_pad - in_dim), (0, h_pad - h_dim)))
    b1p = jnp.pad(b1.astype(jnp.float32), (0, h_pad - h_dim)).reshape(1, h_pad)
    w2p = jnp.pad(w2.astype(compute_dtype),
                  ((0, h_pad - h_dim), (0, out_pad - out_d)))
    b2p = jnp.pad(b2.astype(jnp.float32), (0, out_pad - out_d)).reshape(1, out_pad)
    return w1p, b1p, w2p, b2p


# ---------------------------------------------------------------------------
# Forward
# ---------------------------------------------------------------------------
@functools.partial(jax.jit, static_argnames=("out_d", "tile_m", "force_streaming"))
def mlp_forward(x, w1p, b1p, w2p, b2p, *, out_d, tile_m=None, force_streaming=False):
    """x: (batch, seq, in_dim); params from `prepare_params`.

    Returns (batch, seq, out_d) in x.dtype.
    """
    batch, seq, in_dim = x.shape
    in_pad, h_pad = w1p.shape
    out_pad = w2p.shape[1]
    compute_dtype = w1p.dtype
    out_dtype = x.dtype
    out_itemsize = jnp.dtype(out_dtype).itemsize
    m = batch * seq

    weight_bytes = (in_pad * h_pad + h_pad * out_pad) * jnp.dtype(compute_dtype).itemsize
    resident = (not force_streaming) and (weight_bytes <= _RESIDENT_WEIGHT_LIMIT)

    # Hidden-reduction chunk for the streaming path (h_pad is a 256 multiple).
    tk = 512 if (h_pad % 512 == 0) else 256
    tk = min(tk, h_pad)

    # ---- row tile geometry ---------------------------------------------------
    # Larger row tiles raise arithmetic intensity w.r.t. weight bytes on the
    # streaming path (tile_m FLOPs per weight byte).  512 clears the roofline on
    # v5e/v7x; pass tile_m=768/1024 on v6e for very large m if still streaming.
    tm = 512 if tile_m is None else int(tile_m)
    if m <= 256:
        tm = _round_up(max(m, 8), 16)                 # single small tile
    else:
        tm = min(tm, _round_up(m, 128))
        # keep >= 2 row tiles so both v7x TensorCores get work on the parallel axis
        while tm > 128 and _round_up(m, tm) // tm < 2:
            tm //= 2

    def _vmem_estimate(tm_):
        if resident:
            return (2 * tm_ * in_pad * 2                    # x blocks (bf16, dbl-buf)
                    + 2 * weight_bytes                      # W1+W2 (assume dbl-buf)
                    + 2 * (h_pad + out_pad) * 4             # biases
                    + 2 * tm_ * out_pad * out_itemsize      # out blocks
                    + tm_ * h_pad * 6)                      # h intermediate (f32 + bf16)
        return (2 * tm_ * in_pad * 2                        # x blocks
                + 2 * in_pad * tk * 2 + 2 * tk * out_pad * 2   # W1/W2 chunks
                + 2 * (tk + out_pad) * 4                    # bias chunks
                + 2 * tm_ * out_pad * out_itemsize          # out blocks
                + tm_ * out_pad * 4                         # f32 accumulator scratch
                + tm_ * tk * 6)                             # h chunk (f32 + bf16)

    while tm > 128 and _vmem_estimate(tm) > _VMEM_BUDGET:
        tm = max(128, _round_up(tm // 2, 16))

    m_pad = _round_up(m, tm)
    grid_m = m_pad // tm

    # ---- activations: cast + zero-pad (padding contributes exactly zero) ------
    x2d = x.reshape(m, in_dim).astype(compute_dtype)
    if (m_pad - m) or (in_pad - in_dim):
        x2d = jnp.pad(x2d, ((0, m_pad - m), (0, in_pad - in_dim)))

    flops = 2 * m * (in_dim * h_pad + h_pad * out_d)

    if resident:
        bytes_accessed = int(m_pad * in_pad * 2 + weight_bytes
                             + (h_pad + out_pad) * 4
                             + m_pad * out_pad * out_itemsize)
        out2d = pl.pallas_call(
            _mlp_resident_kernel,
            out_shape=jax.ShapeDtypeStruct((m_pad, out_pad), out_dtype),
            grid_spec=pltpu.PrefetchScalarGridSpec(
                num_scalar_prefetch=0,
                grid=(grid_m,),
                in_specs=[
                    pl.BlockSpec((tm, in_pad), lambda i: (i, 0)),      # x rows
                    pl.BlockSpec((in_pad, h_pad), lambda i: (0, 0)),   # W1 (resident)
                    pl.BlockSpec((1, h_pad), lambda i: (0, 0)),        # b1
                    pl.BlockSpec((h_pad, out_pad), lambda i: (0, 0)),  # W2 (resident)
                    pl.BlockSpec((1, out_pad), lambda i: (0, 0)),      # b2
                ],
                out_specs=pl.BlockSpec((tm, out_pad), lambda i: (i, 0)),
            ),
            compiler_params=pltpu.CompilerParams(
                dimension_semantics=("parallel",),
                vmem_limit_bytes=_VMEM_LIMIT),
            cost_estimate=pl.CostEstimate(
                flops=flops, transcendentals=0, bytes_accessed=bytes_accessed),
        )(x2d, w1p, b1p, w2p, b2p)
    else:
        grid = (grid_m, h_pad // tk)
        bytes_accessed = int(m_pad * in_pad * 2
                             + grid_m * weight_bytes       # W1/W2 re-streamed per row tile
                             + (h_pad + out_pad) * 4
                             + m_pad * out_pad * out_itemsize)
        out2d = pl.pallas_call(
            _mlp_stream_kernel,
            out_shape=jax.ShapeDtypeStruct((m_pad, out_pad), out_dtype),
            grid_spec=pltpu.PrefetchScalarGridSpec(
                num_scalar_prefetch=0,
                grid=grid,
                in_specs=[
                    pl.BlockSpec((tm, in_pad), lambda i, k: (i, 0)),    # x rows
                    pl.BlockSpec((in_pad, tk), lambda i, k: (0, k)),    # W1[:, k]
                    pl.BlockSpec((1, tk), lambda i, k: (0, k)),         # b1[k]
                    pl.BlockSpec((tk, out_pad), lambda i, k: (k, 0)),   # W2[k, :]
                    pl.BlockSpec((1, out_pad), lambda i, k: (0, 0)),    # b2
                ],
                out_specs=pl.BlockSpec((tm, out_pad), lambda i, k: (i, 0)),
                scratch_shapes=[pltpu.VMEM((tm, out_pad), jnp.float32)],
            ),
            compiler_params=pltpu.CompilerParams(
                dimension_semantics=("parallel", "arbitrary"),
                vmem_limit_bytes=_VMEM_LIMIT),
            cost_estimate=pl.CostEstimate(
                flops=flops, transcendentals=0, bytes_accessed=bytes_accessed),
        )(x2d, w1p, b1p, w2p, b2p)

    return out2d[:m, :out_d].reshape(batch, seq, out_d)


def mlp_transformer(x, w1, b1, w2, b2, **kwargs):
    """One-shot convenience wrapper (prefer prepare_params + mlp_forward)."""
    params = prepare_params(w1, b1, w2, b2)
    return mlp_forward(x, *params, out_d=w2.shape[1], **kwargs)


def init_params(key, in_dim, h_dim, out_d, dtype=jnp.float32):
    """Deterministic nn.Linear-like init; weights stored transposed (in, out)."""
    k1, k2, k3, k4 = jax.random.split(key, 4)
    bound1 = 1.0 / (in_dim ** 0.5)
    bound2 = 1.0 / (h_dim ** 0.5)
    w1 = jax.random.uniform(k1, (in_dim, h_dim), dtype, -bound1, bound1)
    b1 = jax.random.uniform(k2, (h_dim,), dtype, -bound1, bound1)
    w2 = jax.random.uniform(k3, (h_dim, out_d), dtype, -bound2, bound2)
    b2 = jax.random.uniform(k4, (out_d,), dtype, -bound2, bound2)
    return w1, b1, w2, b2


if __name__ == "__main__":
    master_key = jax.random.PRNGKey(0)

    def run_case(batch, seq, in_dim, h_dim, out_d, key, **kw):
        kx, kp = jax.random.split(key)
        x = jax.random.normal(kx, (batch, seq, in_dim), jnp.float32)
        w1, b1, w2, b2 = init_params(kp, in_dim, h_dim, out_d)

        params = prepare_params(w1, b1, w2, b2)          # one-time cast + pad
        out = mlp_forward(x, *params, out_d=out_d, **kw)
        out = jax.block_until_ready(out)
        assert out.shape == (batch, seq, out_d)

        # Reference 1: mirror the kernel's bf16-compute / f32-accumulate math.
        xb = x.reshape(-1, in_dim).astype(jnp.bfloat16)
        hb = jnp.dot(xb, w1.astype(jnp.bfloat16),
                     preferred_element_type=jnp.float32) + b1
        hb = jnp.maximum(hb, 0.0).astype(jnp.bfloat16)
        ref_bf16 = (jnp.dot(hb, w2.astype(jnp.bfloat16),
                            preferred_element_type=jnp.float32) + b2
                    ).reshape(batch, seq, out_d).astype(out.dtype)
        assert jnp.allclose(out, ref_bf16, atol=2e-3, rtol=2e-3), "bf16-path mismatch"

        # Reference 2: full f32 math (looser tolerance, bf16 rounding expected).
        ref_f32 = (jnp.maximum(x.reshape(-1, in_dim) @ w1 + b1, 0.0) @ w2 + b2
                   ).reshape(batch, seq, out_d)
        assert jnp.allclose(out, ref_f32, atol=5e-2, rtol=5e-2), "f32 reference mismatch"

    # Small shapes consistent with the module (out_d defaults to in_dim).
    # 1) tiny case -> weight-resident fast path
    run_case(2, 8, 32, 128, 32, jax.random.fold_in(master_key, 0))
    # 2) same tiny case forced through the streaming (hidden-chunked) path
    run_case(2, 8, 32, 128, 32, jax.random.fold_in(master_key, 0),
             force_streaming=True)
    # 3) multi row-tile, multi hidden-chunk streaming path
    run_case(2, 192, 96, 768, 96, jax.random.fold_in(master_key, 1),
             force_streaming=True)
    # 4) multi row-tile weight-resident path (constant weight blocks across grid)
    run_case(2, 192, 96, 768, 96, jax.random.fold_in(master_key, 1))

    print("KERNEL_OK")
</pallas_src>

<mosaic_0001>
module attributes {stable_mosaic.version = 11 : i64} {
  func.func @_mlp_resident_kernel(%arg0: i32, %arg1: memref<16x128xbf16, #tpu.memory_space<vmem>>, %arg2: memref<128x256xbf16, #tpu.memory_space<vmem>>, %arg3: memref<1x256xf32, #tpu.memory_space<vmem>>, %arg4: memref<256x128xbf16, #tpu.memory_space<vmem>>, %arg5: memref<1x128xf32, #tpu.memory_space<vmem>>, %arg6: memref<16x128xf32, #tpu.memory_space<vmem>>) attributes {dimension_semantics = [#tpu.dimension_semantics<parallel>], iteration_bounds = array<i64: 1>, scalar_prefetch = 0 : i64, scratch_operands = 0 : i64, tpu.core_type = #tpu.core_type<tc>, window_params = [{transform_indices = @transform_0, window_bounds = array<i64: 16, 128>}, {pipeline_mode = #tpu.pipeline_mode<synchronous>, transform_indices = @transform_1, window_bounds = array<i64: 128, 256>}, {pipeline_mode = #tpu.pipeline_mode<synchronous>, transform_indices = @transform_2, window_bounds = array<i64: 1, 256>}, {pipeline_mode = #tpu.pipeline_mode<synchronous>, transform_indices = @transform_3, window_bounds = array<i64: 256, 128>}, {pipeline_mode = #tpu.pipeline_mode<synchronous>, transform_indices = @transform_4, window_bounds = array<i64: 1, 128>}, {transform_indices = @transform_5, window_bounds = array<i64: 16, 128>}]} {
    %c0 = arith.constant 0 : index
    %c0_0 = arith.constant 0 : index
    %0 = vector.load %arg1[%c0, %c0_0] : memref<16x128xbf16, #tpu.memory_space<vmem>>, vector<16x128xbf16>
    %c0_1 = arith.constant 0 : index
    %c0_2 = arith.constant 0 : index
    %1 = vector.load %arg2[%c0_1, %c0_2] : memref<128x256xbf16, #tpu.memory_space<vmem>>, vector<128x256xbf16>
    %cst = arith.constant dense<0.000000e+00> : vector<16x256xf32>
    %2 = tpu.matmul %0, %1, %cst {dimension_numbers = #tpu.dot_dimension_numbers<[1], [0], [0], [1], [0, 0, 1, 1], [], []>} : vector<16x128xbf16>, vector<128x256xbf16>, vector<16x256xf32> -> vector<16x256xf32>
    %c0_3 = arith.constant 0 : index
    %c0_4 = arith.constant 0 : index
    %3 = vector.load %arg3[%c0_3, %c0_4] : memref<1x256xf32, #tpu.memory_space<vmem>>, vector<1x256xf32>
    %4 = vector.broadcast %3 : vector<1x256xf32> to vector<16x256xf32>
    %5 = arith.addf %2, %4 : vector<16x256xf32>
    %cst_5 = arith.constant 0.000000e+00 : f32
    %6 = vector.broadcast %cst_5 : f32 to vector<16x256xf32>
    %7 = arith.maximumf %5, %6 : vector<16x256xf32>
    %8 = arith.truncf %7 : vector<16x256xf32> to vector<16x256xbf16>
    %c0_6 = arith.constant 0 : index
    %c0_7 = arith.constant 0 : index
    %9 = vector.load %arg4[%c0_6, %c0_7] : memref<256x128xbf16, #tpu.memory_space<vmem>>, vector<256x128xbf16>
    %cst_8 = arith.constant dense<0.000000e+00> : vector<16x128xf32>
    %10 = tpu.matmul %8, %9, %cst_8 {dimension_numbers = #tpu.dot_dimension_numbers<[1], [0], [0], [1], [0, 0, 1, 1], [], []>} : vector<16x256xbf16>, vector<256x128xbf16>, vector<16x128xf32> -> vector<16x128xf32>
    %c0_9 = arith.constant 0 : index
    %c0_10 = arith.constant 0 : index
    %11 = vector.load %arg5[%c0_9, %c0_10] : memref<1x128xf32, #tpu.memory_space<vmem>>, vector<1x128xf32>
    %12 = vector.broadcast %11 : vector<1x128xf32> to vector<16x128xf32>
    %13 = arith.addf %10, %12 : vector<16x128xf32>
    %c0_11 = arith.constant 0 : index
    %c0_12 = arith.constant 0 : index
    %14 = vector.load %arg6[%c0_11, %c0_12] : memref<16x128xf32, #tpu.memory_space<vmem>>, vector<16x128xf32>
    tpu.vector_store %arg6[%c0_11, %c0_12], %13 {strides = array<i32>} : memref<16x128xf32, #tpu.memory_space<vmem>>, vector<16x128xf32>,
    return
  }
  func.func @transform_0(%arg0: i32) -> (i32, i32) {
    %c0_i32 = arith.constant 0 : i32
    %c0_i32_0 = arith.constant 0 : i32
    return %arg0, %c0_i32 : i32, i32
  }
  func.func @transform_1(%arg0: i32) -> (i32, i32) {
    %c0_i32 = arith.constant 0 : i32
    %c0_i32_0 = arith.constant 0 : i32
    %c0_i32_1 = arith.constant 0 : i32
    return %c0_i32, %c0_i32_0 : i32, i32
  }
  func.func @transform_2(%arg0: i32) -> (i32, i32) {
    %c0_i32 = arith.constant 0 : i32
    %c0_i32_0 = arith.constant 0 : i32
    %c0_i32_1 = arith.constant 0 : i32
    return %c0_i32, %c0_i32_0 : i32, i32
  }
  func.func @transform_3(%arg0: i32) -> (i32, i32) {
    %c0_i32 = arith.constant 0 : i32
    %c0_i32_0 = arith.constant 0 : i32
    %c0_i32_1 = arith.constant 0 : i32
    return %c0_i32, %c0_i32_0 : i32, i32
  }
  func.func @transform_4(%arg0: i32) -> (i32, i32) {
    %c0_i32 = arith.constant 0 : i32
    %c0_i32_0 = arith.constant 0 : i32
    %c0_i32_1 = arith.constant 0 : i32
    return %c0_i32, %c0_i32_0 : i32, i32
  }
  func.func @transform_5(%arg0: i32) -> (i32, i32) {
    %c0_i32 = arith.constant 0 : i32
    %c0_i32_0 = arith.constant 0 : i32
    return %arg0, %c0_i32 : i32, i32
  }
}

</mosaic_0001>

<llo_original>
// kernel: mlp_forward.1
$region0: #{mlp_forward.1}
  #allocation0 [shape = 'u32[]', space=smem, size = 0x4, offset = 0x4, fixed_abs, tag = 'smem constant byte address 0x4 - core index']
  #allocation1 [shape = 'u32[72,128]{1,0:T(1,128)}', space=vmem, size = 0x9000, scoped, tag = 'internal scratch']
  %s0 = inlined_call_operand.vmem [shape: bf16[16,128], index: 0, kind: input, shape index: {}]
  %s1 = inlined_call_operand.hbm [shape: bf16[128,256], index: 1, kind: input, shape index: {}]
  %s2 = inlined_call_operand.vmem [shape: f32[1,256], index: 2, kind: input, shape index: {}]
  %s3 = inlined_call_operand.hbm [shape: bf16[256,128], index: 3, kind: input, shape index: {}]
  %s4 = inlined_call_operand.vmem [shape: f32[1,128], index: 4, kind: input, shape index: {}]
  %s5 = inlined_call_operand.vmem [shape: f32[16,128], index: 5, kind: output, shape index: {}]
  %s6 = sld [smem:[#allocation0]]
  $region38: #{mlp_forward.1} parent=0
    _
  %s8 = ssub.s32 1, %s6
  %s9 = scalar_select 0, %s8, %s6
  $region1: #{mlp_forward.1} parent=0
    #allocation2 [shape = 'u8[65536]{0}', space=vmem, size = 0x10000, scoped, tag = 'input window, operand 1, single buffered']
    #allocation3 [shape = 's32[1]{0}', space=sflag, size = 0x4, scoped, tag = 'scoped memory for mlp_forward.1']
    #allocation4 [shape = 'u8[65536]{0}', space=vmem, size = 0x10000, scoped, tag = 'input window, operand 3, single buffered']
    #allocation5 [shape = 's32[1]{0}', space=sflag, size = 0x4, scoped, tag = 'scoped memory for mlp_forward.1']
    %10 = vsyncpa [#allocation3], 0
    %11 = vsyncpa [#allocation5], 0
    // Predicated region
    $region2: #{mlp_forward.1} parent=1 // pred_check
      _
    $region3: #{mlp_forward.1} parent=1 // pred_check_branch
      %13 = sbr.rel (0) target = $region5
    $region4: #{mlp_forward.1} parent=1 // pred_region
      _
    $region5: #{mlp_forward.1} parent=1 // pred_fallthru
      _
    // Predicated region
    $region6: #{mlp_forward.1} parent=1 // pred_check
      _
    $region7: #{mlp_forward.1} parent=1 // pred_check_branch
      %15 = sbr.rel (0) target = $region9
    $region8: #{mlp_forward.1} parent=1 // pred_region
      %17 = vsyncadd [#allocation3], 0
      %s18 = sshll.u32 %s1, 4
      %s19 = int_to_ptr.hbm [resolvable:$true] %s18
      %s20 = sshll.u32 [#allocation2], 4
      %s21 = int_to_ptr.vmem [resolvable:$true] %s20
      %26 = dma.hbm_to_vmem [thread:$0]  %s19, 2048, %s21, [#allocation3], 128, 128, 8
    $region9: #{mlp_forward.1} parent=1 // pred_fallthru
      _
    // Predicated region
    $region10: #{mlp_forward.1} parent=1 // pred_check
      _
    $region11: #{mlp_forward.1} parent=1 // pred_check_branch
      %28 = sbr.rel (0) target = $region13
    $region12: #{mlp_forward.1} parent=1 // pred_region
      _
    $region13: #{mlp_forward.1} parent=1 // pred_fallthru
      _
    // Predicated region
    $region14: #{mlp_forward.1} parent=1 // pred_check
      _
    $region15: #{mlp_forward.1} parent=1 // pred_check_branch
      %30 = sbr.rel (0) target = $region17
    $region16: #{mlp_forward.1} parent=1 // pred_region
      %32 = vsyncadd [#allocation5], 0
      %s33 = sshll.u32 %s3, 4
      %s34 = int_to_ptr.hbm [resolvable:$true] %s33
      %s35 = sshll.u32 [#allocation4], 4
      %s36 = int_to_ptr.vmem [resolvable:$true] %s35
      %41 = dma.hbm_to_vmem [thread:$0]  %s34, 2048, %s36, [#allocation5], 64, 64, 4
    $region17: #{mlp_forward.1} parent=1 // pred_fallthru
      _
    // Predicated region
    $region18: #{mlp_forward.1} parent=1 // pred_check
      _
    $region19: #{mlp_forward.1} parent=1 // pred_check_branch
      %43 = sbr.rel (0) target = $region21
    $region20: #{mlp_forward.1} parent=1 // pred_region
      _
    $region21: #{mlp_forward.1} parent=1 // pred_fallthru
      _
    // Predicated region
    $region22: #{mlp_forward.1} parent=1 // pred_check
      _
    $region23: #{mlp_forward.1} parent=1 // pred_check_branch
      %45 = sbr.rel (0) target = $region25
    $region24: #{mlp_forward.1} parent=1 // pred_region
      %47 = dma.done [#allocation3], 2048
    $region25: #{mlp_forward.1} parent=1 // pred_fallthru
      _
    // Predicated region
    $region26: #{mlp_forward.1} parent=1 // pred_check
      _
    $region27: #{mlp_forward.1} parent=1 // pred_check_branch
      %49 = sbr.rel (0) target = $region29
    $region28: #{mlp_forward.1} parent=1 // pred_region
      %51 = dma.done [#allocation5], 2048
    $region29: #{mlp_forward.1} parent=1 // pred_fallthru
      _
    %v52 = vld [vmem:[%s0] sm:$0xf]
    %v53 = vld [vmem:[%s0 + $0x4] sm:$0xf]
    %v54 = vld [vmem:[#allocation2] sm:$0xff]
    %v55 = vld [vmem:[#allocation2 + $0x8] sm:$0xff]
    %v56 = vld [vmem:[#allocation2 + $0x10] sm:$0xff]
    %v57 = vld [vmem:[#allocation2 + $0x18] sm:$0xff]
    %v58 = vld [vmem:[#allocation2 + $0x20] sm:$0xff]
    %v59 = vld [vmem:[#allocation2 + $0x28] sm:$0xff]
    %v60 = vld [vmem:[#allocation2 + $0x30] sm:$0xff]
    %v61 = vld [vmem:[#allocation2 + $0x38] sm:$0xff]
    %v62 = vld [vmem:[#allocation2 + $0x40] sm:$0xff]
    %v63 = vld [vmem:[#allocation2 + $0x48] sm:$0xff]
    %v64 = vld [vmem:[#allocation2 + $0x50] sm:$0xff]
    %v65 = vld [vmem:[#allocation2 + $0x58] sm:$0xff]
    %v66 = vld [vmem:[#allocation2 + $0x60] sm:$0xff]
    %v67 = vld [vmem:[#allocation2 + $0x68] sm:$0xff]
    %v68 = vld [vmem:[#allocation2 + $0x70] sm:$0xff]
    %v69 = vld [vmem:[#allocation2 + $0x78] sm:$0xff]
    %v70 = vld [vmem:[%s2] sm:$0x3]
    %v72 = vperm.slane %v70, 0
    %v73 = vperm.slane %v70, 1
    %v78 = vunpack.c.l.b16 %v52
    %v79 = vunpack.c.l.b16 %v53
    %v80 = vpack.c.b16 %v79, %v78
    %v98 = vunpack.c.l.b16 %v54
    %v99 = vunpack.c.h.b16 %v54
    %v100 = vunpack.c.l.b16 %v55
    %v101 = vunpack.c.h.b16 %v55
    %v102 = vunpack.c.l.b16 %v56
    %v103 = vunpack.c.h.b16 %v56
    %v104 = vunpack.c.l.b16 %v57
    %v105 = vunpack.c.h.b16 %v57
    %v106 = vunpack.c.l.b16 %v58
    %v107 = vunpack.c.h.b16 %v58
    %v108 = vunpack.c.l.b16 %v59
    %v109 = vunpack.c.h.b16 %v59
    %v110 = vunpack.c.l.b16 %v60
    %v111 = vunpack.c.h.b16 %v60
    %v112 = vunpack.c.l.b16 %v61
    %v113 = vunpack.c.h.b16 %v61
    %v114 = vunpack.c.l.b16 %v62
    %v115 = vunpack.c.h.b16 %v62
    %v116 = vunpack.c.l.b16 %v63
    %v117 = vunpack.c.h.b16 %v63
    %v118 = vunpack.c.l.b16 %v64
    %v119 = vunpack.c.h.b16 %v64
    %v120 = vunpack.c.l.b16 %v65
    %v121 = vunpack.c.h.b16 %v65
    %v122 = vunpack.c.l.b16 %v66
    %v123 = vunpack.c.h.b16 %v66
    %v124 = vunpack.c.l.b16 %v67
    %v125 = vunpack.c.h.b16 %v67
    %v126 = vunpack.c.l.b16 %v68
    %v127 = vunpack.c.h.b16 %v68
    %v128 = vunpack.c.l.b16 %v69
    %v129 = vunpack.c.h.b16 %v69
    %v130 = vpack.c.b16 %v100, %v98
    %v131 = vpack.c.b16 %v101, %v99
    %v132 = vpack.c.b16 %v104, %v102
    %v133 = vpack.c.b16 %v105, %v103
    %v134 = vpack.c.b16 %v108, %v106
    %v135 = vpack.c.b16 %v109, %v107
    %v136 = vpack.c.b16 %v112, %v110
    %v137 = vpack.c.b16 %v113, %v111
    %v138 = vpack.c.b16 %v116, %v114
    %v139 = vpack.c.b16 %v117, %v115
    %v140 = vpack.c.b16 %v120, %v118
    %v141 = vpack.c.b16 %v121, %v119
    %v142 = vpack.c.b16 %v124, %v122
    %v143 = vpack.c.b16 %v125, %v123
    %v144 = vpack.c.b16 %v128, %v126
    %v145 = vpack.c.b16 %v129, %v127
    %162 = vmatpush.bf16.msra.mxu0 %v144
    %163 = vmatpush.bf16.msra.mxu0 %v142
    %164 = vmatpush.bf16.msra.mxu0 %v140
    %165 = vmatpush.bf16.msra.mxu0 %v138
    %166 = vmatpush.bf16.msra.mxu0 %v136
    %167 = vmatpush.bf16.msra.mxu0 %v134
    %168 = vmatpush.bf16.msra.mxu0 %v132
    %169 = vmatpush.bf16.msra.mxu0 %v130
    %170 = vmatmul.bf16.gmra.mxu0 %v80
    %v171 = vpop.f32.mrf.mxu0
    %v172 = vadd.f32 %v72, %v171
    %v173 = vpop.f32.mrf.mxu0
    %v174 = vadd.f32 %v72, %v173
    %175 = vdwg.mxu0
    %176 = vmatpush.bf16.msra.mxu0 %v145
    %177 = vmatpush.bf16.msra.mxu0 %v143
    %178 = vmatpush.bf16.msra.mxu0 %v141
    %179 = vmatpush.bf16.msra.mxu0 %v139
    %180 = vmatpush.bf16.msra.mxu0 %v137
    %181 = vmatpush.bf16.msra.mxu0 %v135
    %182 = vmatpush.bf16.msra.mxu0 %v133
    %183 = vmatpush.bf16.msra.mxu0 %v131
    %184 = vmatmul.bf16.gmra.mxu0 %v80
    %v185 = vpop.f32.mrf.mxu0
    %v186 = vadd.f32 %v73, %v185
    %v187 = vpop.f32.mrf.mxu0
    %v188 = vadd.f32 %v73, %v187
    %189 = vdwg.mxu0
    %v190 = vmax.f32 %v172, 0.0
    %v191 = vmax.f32 %v186, 0.0
    %v192 = vmax.f32 %v174, 0.0
    %v193 = vmax.f32 %v188, 0.0
    %v194 = vpack.c.bf16 %v192, %v190
    %v195 = vpack.c.bf16 %v193, %v191
    %v196 = vld [vmem:[#allocation4] sm:$0xf]
    %v197 = vld [vmem:[#allocation4 + $0x4] sm:$0xf]
    %v198 = vld [vmem:[#allocation4 + $0x8] sm:$0xf]
    %v199 = vld [vmem:[#allocation4 + $0xc] sm:$0xf]
    %v200 = vld [vmem:[#allocation4 + $0x10] sm:$0xf]
    %v201 = vld [vmem:[#allocation4 + $0x14] sm:$0xf]
    %v202 = vld [vmem:[#allocation4 + $0x18] sm:$0xf]
    %v203 = vld [vmem:[#allocation4 + $0x1c] sm:$0xf]
    %v204 = vld [vmem:[#allocation4 + $0x20] sm:$0xf]
    %v205 = vld [vmem:[#allocation4 + $0x24] sm:$0xf]
    %v206 = vld [vmem:[#allocation4 + $0x28] sm:$0xf]
    %v207 = vld [vmem:[#allocation4 + $0x2c] sm:$0xf]
    %v208 = vld [vmem:[#allocation4 + $0x30] sm:$0xf]
    %v209 = vld [vmem:[#allocation4 + $0x34] sm:$0xf]
    %v210 = vld [vmem:[#allocation4 + $0x38] sm:$0xf]
    %v211 = vld [vmem:[#allocation4 + $0x3c] sm:$0xf]
    %v212 = vld [vmem:[#allocation4 + $0x40] sm:$0xf]
    %v213 = vld [vmem:[#allocation4 + $0x44] sm:$0xf]
    %v214 = vld [vmem:[#allocation4 + $0x48] sm:$0xf]
    %v215 = vld [vmem:[#allocation4 + $0x4c] sm:$0xf]
    %v216 = vld [vmem:[#allocation4 + $0x50] sm:$0xf]
    %v217 = vld [vmem:[#allocation4 + $0x54] sm:$0xf]
    %v218 = vld [vmem:[#allocation4 + $0x58] sm:$0xf]
    %v219 = vld [vmem:[#allocation4 + $0x5c] sm:$0xf]
    %v220 = vld [vmem:[#allocation4 + $0x60] sm:$0xf]
    %v221 = vld [vmem:[#allocation4 + $0x64] sm:$0xf]
    %v222 = vld [vmem:[#allocation4 + $0x68] sm:$0xf]
    %v223 = vld [vmem:[#allocation4 + $0x6c] sm:$0xf]
    %v224 = vld [vmem:[#allocation4 + $0x70] sm:$0xf]
    %v225 = vld [vmem:[#allocation4 + $0x74] sm:$0xf]
    %v226 = vld [vmem:[#allocation4 + $0x78] sm:$0xf]
    %v227 = vld [vmem:[#allocation4 + $0x7c] sm:$0xf]
    %v228 = vld [vmem:[%s4] sm:$0x1]
    %v230 = vperm.slane %v228, 0
    %v264 = vunpack.c.l.b16 %v196
    %v265 = vunpack.c.l.b16 %v197
    %v266 = vunpack.c.l.b16 %v198
    %v267 = vunpack.c.l.b16 %v199
    %v268 = vunpack.c.l.b16 %v200
    %v269 = vunpack.c.l.b16 %v201
    %v270 = vunpack.c.l.b16 %v202
    %v271 = vunpack.c.l.b16 %v203
    %v272 = vunpack.c.l.b16 %v204
    %v273 = vunpack.c.l.b16 %v205
    %v274 = vunpack.c.l.b16 %v206
    %v275 = vunpack.c.l.b16 %v207
    %v276 = vunpack.c.l.b16 %v208
    %v277 = vunpack.c.l.b16 %v209
    %v278 = vunpack.c.l.b16 %v210
    %v279 = vunpack.c.l.b16 %v211
    %v280 = vunpack.c.l.b16 %v212
    %v281 = vunpack.c.l.b16 %v213
    %v282 = vunpack.c.l.b16 %v214
    %v283 = vunpack.c.l.b16 %v215
    %v284 = vunpack.c.l.b16 %v216
    %v285 = vunpack.c.l.b16 %v217
    %v286 = vunpack.c.l.b16 %v218
    %v287 = vunpack.c.l.b16 %v219
    %v288 = vunpack.c.l.b16 %v220
    %v289 = vunpack.c.l.b16 %v221
    %v290 = vunpack.c.l.b16 %v222
    %v291 = vunpack.c.l.b16 %v223
    %v292 = vunpack.c.l.b16 %v224
    %v293 = vunpack.c.l.b16 %v225
    %v294 = vunpack.c.l.b16 %v226
    %v295 = vunpack.c.l.b16 %v227
    %v296 = vpack.c.b16 %v265, %v264
    %v297 = vpack.c.b16 %v267, %v266
    %v298 = vpack.c.b16 %v269, %v268
    %v299 = vpack.c.b16 %v271, %v270
    %v300 = vpack.c.b16 %v273, %v272
    %v301 = vpack.c.b16 %v275, %v274
    %v302 = vpack.c.b16 %v277, %v276
    %v303 = vpack.c.b16 %v279, %v278
    %v304 = vpack.c.b16 %v281, %v280
    %v305 = vpack.c.b16 %v283, %v282
    %v306 = vpack.c.b16 %v285, %v284
    %v307 = vpack.c.b16 %v287, %v286
    %v308 = vpack.c.b16 %v289, %v288
    %v309 = vpack.c.b16 %v291, %v290
    %v310 = vpack.c.b16 %v293, %v292
    %v311 = vpack.c.b16 %v295, %v294
    %328 = vmatpush.bf16.msra.mxu0 %v303
    %329 = vmatpush.bf16.msra.mxu0 %v302
    %330 = vmatpush.bf16.msra.mxu0 %v301
    %331 = vmatpush.bf16.msra.mxu0 %v300
    %332 = vmatpush.bf16.msra.mxu0 %v299
    %333 = vmatpush.bf16.msra.mxu0 %v298
    %334 = vmatpush.bf16.msra.mxu0 %v297
    %335 = vmatpush.bf16.msra.mxu0 %v296
    %336 = vmatmul.bf16.gmra.mxu0 %v194
    %v337 = vpop.f32.mrf.mxu0
    %v338 = vadd.f32 %v230, %v337
    %v339 = vpop.f32.mrf.mxu0
    %v340 = vadd.f32 %v230, %v339
    %341 = vdwg.mxu0
    %342 = vmatpush.bf16.msra.mxu0 %v311
    %343 = vmatpush.bf16.msra.mxu0 %v310
    %344 = vmatpush.bf16.msra.mxu0 %v309
    %345 = vmatpush.bf16.msra.mxu0 %v308
    %346 = vmatpush.bf16.msra.mxu0 %v307
    %347 = vmatpush.bf16.msra.mxu0 %v306
    %348 = vmatpush.bf16.msra.mxu0 %v305
    %349 = vmatpush.bf16.msra.mxu0 %v304
    %350 = vmatmul.bf16.gmra.mxu0 %v195
    %v351 = vpop.f32.mrf.mxu0
    %v352 = vadd.f32 %v338, %v351
    %v353 = vpop.f32.mrf.mxu0
    %v354 = vadd.f32 %v340, %v353
    %355 = vdwg.mxu0
    %356 = vst [vmem:[%s5] sm:$0xff] %v352
    %357 = vst [vmem:[%s5 + $0x8] sm:$0xff] %v354
    // Predicated region
    $region30: #{mlp_forward.1} parent=1 // pred_check
      _
    $region31: #{mlp_forward.1} parent=1 // pred_check_branch
      %359 = sbr.rel (0) target = $region33
    $region32: #{mlp_forward.1} parent=1 // pred_region
      _
    $region33: #{mlp_forward.1} parent=1 // pred_fallthru
      _
    // Predicated region
    $region34: #{mlp_forward.1} parent=1 // pred_check
      _
    $region35: #{mlp_forward.1} parent=1 // pred_check_branch
      %361 = sbr.rel (0) target = $region37
    $region36: #{mlp_forward.1} parent=1 // pred_region
      _
    $region37: #{mlp_forward.1} parent=1 // pred_fallthru
      _
    %362 = vsyncpa [#allocation3], 1
    %363 = vsyncpa [#allocation5], 1

</llo_original>
